<compile_context>
chip_gen: v6e
topology: v6e:2x2x1
jax: 0.10.0
libtpu: 0.0.40
codegen_flags: <defaults>
</compile_context>

<pallas_src>
import jax
import jax.numpy as jnp
from jax.experimental import pallas as pl
from jax.experimental.pallas import tpu as pltpu


def _round_up(x, m):
    return ((x + m - 1) // m) * m


def _bt_kernel(i_ref, j_ref, k_ref, ut_ref, vt_ref, o_ref):
    # i/j/k_ref: (1, 1, TB) int32 index tiles (batch on lanes).
    # ut_ref / vt_ref: (d, num_models) float32 transposed tables (VMEM-resident).
    # o_ref: (1, 1, TB) float32 output tile.
    idx_i = i_ref[0]                      # (1, TB)
    idx_j = j_ref[0]
    idx_k = k_ref[0]
    u_t = ut_ref[...].astype(jnp.float32)  # (d, nm)
    v_t = vt_ref[...].astype(jnp.float32)

    nm = u_t.shape[1]
    tb = idx_i.shape[-1]

    # One-hot selectors: model id on sublanes, batch element on lanes.
    m_iota = jax.lax.broadcasted_iota(jnp.int32, (nm, tb), 0)
    oh_i = (m_iota == idx_i).astype(jnp.float32)   # (nm, TB)
    oh_j = (m_iota == idx_j).astype(jnp.float32)
    oh_k = (m_iota == idx_k).astype(jnp.float32)

    # Gather rows on the MXU: (d, nm) @ (nm, TB) -> (d, TB). Exact (0/1 weights).
    u_i = jnp.dot(u_t, oh_i, preferred_element_type=jnp.float32)
    v_j = jnp.dot(v_t, oh_j, preferred_element_type=jnp.float32)
    v_k = jnp.dot(v_t, oh_k, preferred_element_type=jnp.float32)

    dj = u_i - v_j
    dk = u_i - v_k
    # sj = ||u_i - v_j||^2, sk = ||u_i - v_k||^2  (sublane reduce -> (1, TB))
    sj = jnp.sum(dj * dj, axis=0, keepdims=True)
    sk = jnp.sum(dk * dk, axis=0, keepdims=True)

    # score_j - score_k = (-sj) - (-sk) = sk - sj
    o_ref[0] = jax.nn.sigmoid(sk - sj)


def vector_bt_norm(u_weight, v_weight, i_idx, j_idx, k_idx, *, max_tile_b=512):
    """Pallas implementation of VectorBT_norm.forward.

    u_weight, v_weight: [num_models, d] float32 embedding tables.
    i_idx, j_idx, k_idx: [B] integer index arrays.
    Returns: [B] float32 = sigmoid(score_j - score_k).
    """
    num_models, d = u_weight.shape
    (B,) = i_idx.shape

    # Lane-dense batch tile: multiple of 128, up to max_tile_b.
    TB = min(_round_up(max_tile_b, 128), _round_up(max(B, 1), 128))
    num_tiles = pl.cdiv(B, TB)
    B_pad = num_tiles * TB

    def prep_idx(idx):
        idx = idx.astype(jnp.int32)
        idx = jnp.pad(idx, (0, B_pad - B))          # pad with row 0 (valid index)
        return idx.reshape(num_tiles, 1, TB)

    i2 = prep_idx(i_idx)
    j2 = prep_idx(j_idx)
    k2 = prep_idx(k_idx)

    # Transpose tables once in the wrapper so d sits on sublanes and the batch
    # stays on the lane axis inside the kernel.
    # TODO(synk): if num_models * d grows beyond the VMEM budget (v7x: 64 MiB),
    # fall back to a streamed row-gather design instead of resident tables.
    u_t = u_weight.astype(jnp.float32).T            # (d, num_models)
    v_t = v_weight.astype(jnp.float32).T            # (d, num_models)

    idx_spec = pl.BlockSpec((1, 1, TB), lambda t: (t, 0, 0))
    tab_spec = pl.BlockSpec((d, num_models), lambda t: (0, 0))  # resident: loaded once

    out = pl.pallas_call(
        _bt_kernel,
        out_shape=jax.ShapeDtypeStruct((num_tiles, 1, TB), jnp.float32),
        grid=(num_tiles,),
        in_specs=[idx_spec, idx_spec, idx_spec, tab_spec, tab_spec],
        out_specs=pl.BlockSpec((1, 1, TB), lambda t: (t, 0, 0)),
        compiler_params=pltpu.CompilerParams(
            dimension_semantics=("parallel",),
        ),
    )(i2, j2, k2, u_t, v_t)

    return out.reshape(B_pad)[:B]


def vector_bt_norm_ref(u_weight, v_weight, i_idx, j_idx, k_idx):
    """Plain-JAX reference mirroring the PyTorch forward."""
    u_i = u_weight[i_idx]
    v_j = v_weight[j_idx]
    v_k = v_weight[k_idx]
    score_j = -jnp.sum((u_i - v_j) ** 2, axis=-1)
    score_k = -jnp.sum((u_i - v_k) ** 2, axis=-1)
    return jax.nn.sigmoid(score_j - score_k)


if __name__ == "__main__":
    num_models = 16
    d = 32
    B = 8

    key = jax.random.PRNGKey(0)
    ku, kv, ki, kj, kk = jax.random.split(key, 5)

    # nn.init.normal_(weight, mean=0.0, std=0.1)
    u_weight = 0.1 * jax.random.normal(ku, (num_models, d), dtype=jnp.float32)
    v_weight = 0.1 * jax.random.normal(kv, (num_models, d), dtype=jnp.float32)

    i_idx = jax.random.randint(ki, (B,), 0, num_models, dtype=jnp.int32)
    j_idx = jax.random.randint(kj, (B,), 0, num_models, dtype=jnp.int32)
    k_idx = jax.random.randint(kk, (B,), 0, num_models, dtype=jnp.int32)

    out = vector_bt_norm(u_weight, v_weight, i_idx, j_idx, k_idx)
    out = jax.block_until_ready(out)

    ref = vector_bt_norm_ref(u_weight, v_weight, i_idx, j_idx, k_idx)
    assert out.shape == (B,)
    assert jnp.allclose(out, ref, atol=1e-5, rtol=1e-5), (out, ref)

    print("KERNEL_OK")
</pallas_src>

<mosaic_0001>
module attributes {stable_mosaic.version = 11 : i64} {
  func.func @_bt_kernel(%arg0: i32, %arg1: memref<1x1x128xi32, #tpu.memory_space<vmem>>, %arg2: memref<1x1x128xi32, #tpu.memory_space<vmem>>, %arg3: memref<1x1x128xi32, #tpu.memory_space<vmem>>, %arg4: memref<32x16xf32, #tpu.memory_space<vmem>>, %arg5: memref<32x16xf32, #tpu.memory_space<vmem>>, %arg6: memref<1x1x128xf32, #tpu.memory_space<vmem>>) attributes {dimension_semantics = [#tpu.dimension_semantics<parallel>], iteration_bounds = array<i64: 1>, scalar_prefetch = 0 : i64, scratch_operands = 0 : i64, tpu.core_type = #tpu.core_type<tc>, window_params = [{transform_indices = @transform_0, window_bounds = array<i64: 1, 1, 128>}, {transform_indices = @transform_1, window_bounds = array<i64: 1, 1, 128>}, {transform_indices = @transform_2, window_bounds = array<i64: 1, 1, 128>}, {pipeline_mode = #tpu.pipeline_mode<synchronous>, transform_indices = @transform_3, window_bounds = array<i64: 32, 16>}, {pipeline_mode = #tpu.pipeline_mode<synchronous>, transform_indices = @transform_4, window_bounds = array<i64: 32, 16>}, {transform_indices = @transform_5, window_bounds = array<i64: 1, 1, 128>}]} {
    %c0 = arith.constant 0 : index
    %c0_0 = arith.constant 0 : index
    %c0_1 = arith.constant 0 : index
    %0 = vector.load %arg1[%c0, %c0_0, %c0_1] : memref<1x1x128xi32, #tpu.memory_space<vmem>>, vector<1x1x128xi32>
    %1 = vector.shape_cast %0 : vector<1x1x128xi32> to vector<1x128xi32>
    %c0_2 = arith.constant 0 : index
    %c0_3 = arith.constant 0 : index
    %c0_4 = arith.constant 0 : index
    %2 = vector.load %arg2[%c0_2, %c0_3, %c0_4] : memref<1x1x128xi32, #tpu.memory_space<vmem>>, vector<1x1x128xi32>
    %3 = vector.shape_cast %2 : vector<1x1x128xi32> to vector<1x128xi32>
    %c0_5 = arith.constant 0 : index
    %c0_6 = arith.constant 0 : index
    %c0_7 = arith.constant 0 : index
    %4 = vector.load %arg3[%c0_5, %c0_6, %c0_7] : memref<1x1x128xi32, #tpu.memory_space<vmem>>, vector<1x1x128xi32>
    %5 = vector.shape_cast %4 : vector<1x1x128xi32> to vector<1x128xi32>
    %c0_8 = arith.constant 0 : index
    %c0_9 = arith.constant 0 : index
    %6 = vector.load %arg4[%c0_8, %c0_9] : memref<32x16xf32, #tpu.memory_space<vmem>>, vector<32x16xf32>
    %c0_10 = arith.constant 0 : index
    %c0_11 = arith.constant 0 : index
    %7 = vector.load %arg5[%c0_10, %c0_11] : memref<32x16xf32, #tpu.memory_space<vmem>>, vector<32x16xf32>
    %8 = tpu.iota {dimensions = array<i32: 0>} : vector<16x128xi32>
    %9 = vector.broadcast %1 : vector<1x128xi32> to vector<16x128xi32>
    %10 = arith.cmpi eq, %8, %9 : vector<16x128xi32>
    %11 = arith.extui %10 : vector<16x128xi1> to vector<16x128xi32>
    %12 = arith.sitofp %11 : vector<16x128xi32> to vector<16x128xf32>
    %13 = vector.broadcast %3 : vector<1x128xi32> to vector<16x128xi32>
    %14 = arith.cmpi eq, %8, %13 : vector<16x128xi32>
    %15 = arith.extui %14 : vector<16x128xi1> to vector<16x128xi32>
    %16 = arith.sitofp %15 : vector<16x128xi32> to vector<16x128xf32>
    %17 = vector.broadcast %5 : vector<1x128xi32> to vector<16x128xi32>
    %18 = arith.cmpi eq, %8, %17 : vector<16x128xi32>
    %19 = arith.extui %18 : vector<16x128xi1> to vector<16x128xi32>
    %20 = arith.sitofp %19 : vector<16x128xi32> to vector<16x128xf32>
    %cst = arith.constant dense<0.000000e+00> : vector<32x128xf32>
    %21 = tpu.matmul %6, %12, %cst {dimension_numbers = #tpu.dot_dimension_numbers<[1], [0], [0], [1], [0, 0, 1, 1], [], []>} : vector<32x16xf32>, vector<16x128xf32>, vector<32x128xf32> -> vector<32x128xf32>
    %cst_12 = arith.constant dense<0.000000e+00> : vector<32x128xf32>
    %22 = tpu.matmul %7, %16, %cst_12 {dimension_numbers = #tpu.dot_dimension_numbers<[1], [0], [0], [1], [0, 0, 1, 1], [], []>} : vector<32x16xf32>, vector<16x128xf32>, vector<32x128xf32> -> vector<32x128xf32>
    %cst_13 = arith.constant dense<0.000000e+00> : vector<32x128xf32>
    %23 = tpu.matmul %7, %20, %cst_13 {dimension_numbers = #tpu.dot_dimension_numbers<[1], [0], [0], [1], [0, 0, 1, 1], [], []>} : vector<32x16xf32>, vector<16x128xf32>, vector<32x128xf32> -> vector<32x128xf32>
    %24 = arith.subf %21, %22 : vector<32x128xf32>
    %25 = arith.subf %21, %23 : vector<32x128xf32>
    %26 = arith.mulf %24, %24 : vector<32x128xf32>
    %cst_14 = arith.constant dense<0.000000e+00> : vector<128xf32>
    %27 = vector.multi_reduction <add>, %26, %cst_14 [0] : vector<32x128xf32> to vector<128xf32>
    %28 = vector.shape_cast %27 : vector<128xf32> to vector<1x128xf32>
    %29 = arith.mulf %25, %25 : vector<32x128xf32>
    %cst_15 = arith.constant dense<0.000000e+00> : vector<128xf32>
    %30 = vector.multi_reduction <add>, %29, %cst_15 [0] : vector<32x128xf32> to vector<128xf32>
    %31 = vector.shape_cast %30 : vector<128xf32> to vector<1x128xf32>
    %32 = arith.subf %31, %28 : vector<1x128xf32>
    %33 = arith.negf %32 : vector<1x128xf32>
    %34 = math.exp %33 : vector<1x128xf32>
    %cst_16 = arith.constant 1.000000e+00 : f32
    %35 = vector.broadcast %cst_16 : f32 to vector<1x128xf32>
    %36 = arith.addf %35, %34 : vector<1x128xf32>
    %37 = arith.divf %35, %36 : vector<1x128xf32>
    %c0_17 = arith.constant 0 : index
    %c0_18 = arith.constant 0 : index
    %c0_19 = arith.constant 0 : index
    %38 = vector.load %arg6[%c0_17, %c0_18, %c0_19] : memref<1x1x128xf32, #tpu.memory_space<vmem>>, vector<1x1x128xf32>
    %39 = vector.shape_cast %38 : vector<1x1x128xf32> to vector<1x128xf32>
    %40 = vector.shape_cast %37 : vector<1x128xf32> to vector<1x1x128xf32>
    tpu.vector_store %arg6[%c0_17, %c0_18, %c0_19], %40 {strides = array<i32>} : memref<1x1x128xf32, #tpu.memory_space<vmem>>, vector<1x1x128xf32>,
    return
  }
  func.func @transform_0(%arg0: i32) -> (i32, i32, i32) {
    %c0_i32 = arith.constant 0 : i32
    %c0_i32_0 = arith.constant 0 : i32
    %c0_i32_1 = arith.constant 0 : i32
    return %arg0, %c0_i32, %c0_i32_0 : i32, i32, i32
  }
  func.func @transform_1(%arg0: i32) -> (i32, i32, i32) {
    %c0_i32 = arith.constant 0 : i32
    %c0_i32_0 = arith.constant 0 : i32
    %c0_i32_1 = arith.constant 0 : i32
    return %arg0, %c0_i32, %c0_i32_0 : i32, i32, i32
  }
  func.func @transform_2(%arg0: i32) -> (i32, i32, i32) {
    %c0_i32 = arith.constant 0 : i32
    %c0_i32_0 = arith.constant 0 : i32
    %c0_i32_1 = arith.constant 0 : i32
    return %arg0, %c0_i32, %c0_i32_0 : i32, i32, i32
  }
  func.func @transform_3(%arg0: i32) -> (i32, i32) {
    %c0_i32 = arith.constant 0 : i32
    %c0_i32_0 = arith.constant 0 : i32
    %c0_i32_1 = arith.constant 0 : i32
    return %c0_i32, %c0_i32_0 : i32, i32
  }
  func.func @transform_4(%arg0: i32) -> (i32, i32) {
    %c0_i32 = arith.constant 0 : i32
    %c0_i32_0 = arith.constant 0 : i32
    %c0_i32_1 = arith.constant 0 : i32
    return %c0_i32, %c0_i32_0 : i32, i32
  }
  func.func @transform_5(%arg0: i32) -> (i32, i32, i32) {
    %c0_i32 = arith.constant 0 : i32
    %c0_i32_0 = arith.constant 0 : i32
    %c0_i32_1 = arith.constant 0 : i32
    return %arg0, %c0_i32, %c0_i32_0 : i32, i32, i32
  }
}

</mosaic_0001>

<llo_original>
// kernel: tpu_custom_call.1
$region0: #{tpu_custom_call.1}
  #allocation0 [shape = 'u32[]', space=smem, size = 0x4, offset = 0x4, fixed_abs, tag = 'smem constant byte address 0x4 - core index']
  #allocation1 [shape = 'u32[144,128]{1,0:T(1,128)}', space=vmem, size = 0x12000, scoped, tag = 'internal scratch']
  %s0 = inlined_call_operand.vmem [shape: s32[1,1,128], index: 0, kind: input, shape index: {}]
  %s1 = inlined_call_operand.vmem [shape: s32[1,1,128], index: 1, kind: input, shape index: {}]
  %s2 = inlined_call_operand.vmem [shape: s32[1,1,128], index: 2, kind: input, shape index: {}]
  %s3 = inlined_call_operand.vmem [shape: f32[32,16], index: 3, kind: input, shape index: {}]
  %s4 = inlined_call_operand.vmem [shape: f32[32,16], index: 4, kind: input, shape index: {}]
  %s5 = inlined_call_operand.hbm [shape: f32[1,1,128], index: 5, kind: output, shape index: {}]
  %s6 = sld [smem:[#allocation0]]
  $region30: #{tpu_custom_call.1} parent=0
    _
  %s8 = ssub.s32 1, %s6
  %s9 = scalar_select 0, %s8, %s6
  $region1: #{tpu_custom_call.1} parent=0
    #allocation2 [shape = 'u8[512]{0}', space=vmem, size = 0x400, scoped, tag = 'output window, operand 0, single buffered']
    #allocation3 [shape = 's32[1]{0}', space=sflag, size = 0x4, scoped, tag = 'scoped memory for tpu_custom_call.1']
    %10 = vsyncpa [#allocation3], 0
    // Predicated region
    $region2: #{tpu_custom_call.1} parent=1 // pred_check
      _
    $region3: #{tpu_custom_call.1} parent=1 // pred_check_branch
      %12 = sbr.rel (0) target = $region5
    $region4: #{tpu_custom_call.1} parent=1 // pred_region
      _
    $region5: #{tpu_custom_call.1} parent=1 // pred_fallthru
      _
    // Predicated region
    $region6: #{tpu_custom_call.1} parent=1 // pred_check
      _
    $region7: #{tpu_custom_call.1} parent=1 // pred_check_branch
      %14 = sbr.rel (0) target = $region9
    $region8: #{tpu_custom_call.1} parent=1 // pred_region
      _
    $region9: #{tpu_custom_call.1} parent=1 // pred_fallthru
      _
    // Predicated region
    $region10: #{tpu_custom_call.1} parent=1 // pred_check
      _
    $region11: #{tpu_custom_call.1} parent=1 // pred_check_branch
      %16 = sbr.rel (0) target = $region13
    $region12: #{tpu_custom_call.1} parent=1 // pred_region
      _
    $region13: #{tpu_custom_call.1} parent=1 // pred_fallthru
      _
    // Predicated region
    $region14: #{tpu_custom_call.1} parent=1 // pred_check
      _
    $region15: #{tpu_custom_call.1} parent=1 // pred_check_branch
      %18 = sbr.rel (0) target = $region17
    $region16: #{tpu_custom_call.1} parent=1 // pred_region
      _
    $region17: #{tpu_custom_call.1} parent=1 // pred_fallthru
      _
    // Predicated region
    $region18: #{tpu_custom_call.1} parent=1 // pred_check
      _
    $region19: #{tpu_custom_call.1} parent=1 // pred_check_branch
      %20 = sbr.rel (0) target = $region21
    $region20: #{tpu_custom_call.1} parent=1 // pred_region
      _
    $region21: #{tpu_custom_call.1} parent=1 // pred_fallthru
      _
    %v21 = vld [vmem:[%s0] sm:$0x1]
    %v22 = vld [vmem:[%s1] sm:$0x1]
    %v23 = vld [vmem:[%s2] sm:$0x1]
    %v24 = vld [vmem:[%s3] sm:$0xff]
    %v25 = vld [vmem:[%s3 + $0x8] sm:$0xff]
    %v26 = vld [vmem:[%s3 + $0x10] sm:$0xff]
    %v27 = vld [vmem:[%s3 + $0x18] sm:$0xff]
    %v28 = vld [vmem:[%s4] sm:$0xff]
    %v29 = vld [vmem:[%s4 + $0x8] sm:$0xff]
    %v30 = vld [vmem:[%s4 + $0x10] sm:$0xff]
    %v31 = vld [vmem:[%s4 + $0x18] sm:$0xff]
    %v32 = vlaneseq
    %v33 = vshrl.u32 %v32, 7
    %v34 = vadd.s32 %v33, 8
    %v35 = vlaneseq
    %v36 = vshrl.u32 %v35, 7
    %v37 = vsub.s32 0, %v36
    %v38 = vrot.slane %v21, %v37
    %vm39 = vcmp.eq.s32.totalorder %v33, %v38
    %vm40 = vcmp.eq.s32.totalorder %v34, %v38
    %v41 = vsel %vm39, 1, 0
    %v42 = vsel %vm40, 1, 0
    %v43 = vcvt.s32.f32 %v41
    %v44 = vcvt.s32.f32 %v42
    %v45 = vlaneseq
    %v46 = vshrl.u32 %v45, 7
    %v47 = vsub.s32 0, %v46
    %v48 = vrot.slane %v22, %v47
    %vm49 = vcmp.eq.s32.totalorder %v33, %v48
    %vm50 = vcmp.eq.s32.totalorder %v34, %v48
    %v51 = vsel %vm49, 1, 0
    %v52 = vsel %vm50, 1, 0
    %v53 = vcvt.s32.f32 %v51
    %v54 = vcvt.s32.f32 %v52
    %v55 = vlaneseq
    %v56 = vshrl.u32 %v55, 7
    %v57 = vsub.s32 0, %v56
    %v58 = vrot.slane %v23, %v57
    %vm59 = vcmp.eq.s32.totalorder %v33, %v58
    %vm60 = vcmp.eq.s32.totalorder %v34, %v58
    %v61 = vsel %vm59, 1, 0
    %v62 = vsel %vm60, 1, 0
    %v63 = vcvt.s32.f32 %v61
    %v64 = vcvt.s32.f32 %v62
    %vm65 = vcmask 130048
    %v67 = vsel %vm65, %v24, 0
    %v70 = vsel %vm65, %v25, 0
    %v73 = vsel %vm65, %v26, 0
    %v76 = vsel %vm65, %v27, 0
    %78 = vmatprep.subr.mxu0 0.0
    %79 = vmatpush1.msra.mxu0 0.0
    %80 = vmatprep.subr.mxu0 0.0
    %81 = vmatpush1.msra.mxu0 0.0
    %82 = vmatprep.subr.mxu0 0.0
    %83 = vmatpush1.msra.mxu0 0.0
    %84 = vmatprep.subr.mxu0 0.0
    %85 = vmatpush1.msra.mxu0 0.0
    %86 = vmatprep.subr.mxu0 0.0
    %87 = vmatpush1.msra.mxu0 0.0
    %88 = vmatprep.subr.mxu0 0.0
    %89 = vmatpush1.msra.mxu0 0.0
    %90 = vmatprep.subr.mxu0 0.0
    %91 = vmatpush1.msra.mxu0 0.0
    %92 = vmatprep.subr.mxu0 0.0
    %93 = vmatpush1.msra.mxu0 0.0
    %94 = vmatprep.subr.mxu0 0.0
    %95 = vmatpush1.msra.mxu0 0.0
    %96 = vmatprep.subr.mxu0 0.0
    %97 = vmatpush1.msra.mxu0 0.0
    %98 = vmatprep.subr.mxu0 0.0
    %99 = vmatpush1.msra.mxu0 0.0
    %100 = vmatprep.subr.mxu0 0.0
    %101 = vmatpush1.msra.mxu0 0.0
    %102 = vmatprep.subr.mxu0 0.0
    %103 = vmatpush1.msra.mxu0 0.0
    %104 = vmatprep.subr.mxu0 0.0
    %105 = vmatpush1.msra.mxu0 0.0
    %106 = vmatprep.subr.mxu0 0.0
    %107 = vmatpush1.msra.mxu0 %v44
    %108 = vmatprep.subr.mxu0 0.0
    %109 = vmatpush1.msra.mxu0 %v43
    %110 = vmatprep.subr.mxu0 0.0
    %111 = vmatpush2.msra.mxu0 0.0
    %112 = vmatprep.subr.mxu0 0.0
    %113 = vmatpush2.msra.mxu0 0.0
    %114 = vmatprep.subr.mxu0 0.0
    %115 = vmatpush2.msra.mxu0 0.0
    %116 = vmatprep.subr.mxu0 0.0
    %117 = vmatpush2.msra.mxu0 0.0
    %118 = vmatprep.subr.mxu0 0.0
    %119 = vmatpush2.msra.mxu0 0.0
    %120 = vmatprep.subr.mxu0 0.0
    %121 = vmatpush2.msra.mxu0 0.0
    %122 = vmatprep.subr.mxu0 0.0
    %123 = vmatpush2.msra.mxu0 0.0
    %124 = vmatprep.subr.mxu0 0.0
    %125 = vmatpush2.msra.mxu0 0.0
    %126 = vmatprep.subr.mxu0 0.0
    %127 = vmatpush2.msra.mxu0 0.0
    %128 = vmatprep.subr.mxu0 0.0
    %129 = vmatpush2.msra.mxu0 0.0
    %130 = vmatprep.subr.mxu0 0.0
    %131 = vmatpush2.msra.mxu0 0.0
    %132 = vmatprep.subr.mxu0 0.0
    %133 = vmatpush2.msra.mxu0 0.0
    %134 = vmatprep.subr.mxu0 0.0
    %135 = vmatpush2.msra.mxu0 0.0
    %136 = vmatprep.subr.mxu0 0.0
    %137 = vmatpush2.msra.mxu0 0.0
    %138 = vmatprep.subr.mxu0 0.0
    %139 = vmatpush2.msra.mxu0 0.0
    %140 = vmatprep.subr.mxu0 0.0
    %141 = vmatpush2.msra.mxu0 0.0
    %142 = vmatprep.mubr.f32.mxu0 0.0
    %143 = vmatmul.mubr.f32.gmra.mxu0 %v67
    %v144 = vpop.f32.mrf.mxu0
    %v145 = vadd.f32 0.0, %v144
    %v146 = vpop.f32.mrf.mxu0
    %147 = vmatprep.mubr.f32.mxu0 0.0
    %148 = vmatmul.mubr.f32.gmra.mxu0 %v70
    %v149 = vpop.f32.mrf.mxu0
    %v150 = vadd.f32 0.0, %v149
    %v151 = vpop.f32.mrf.mxu0
    %152 = vmatprep.mubr.f32.mxu0 0.0
    %153 = vmatmul.mubr.f32.gmra.mxu0 %v73
    %v154 = vpop.f32.mrf.mxu0
    %v155 = vadd.f32 0.0, %v154
    %v156 = vpop.f32.mrf.mxu0
    %157 = vmatprep.mubr.f32.mxu0 0.0
    %158 = vmatmul.mubr.f32.gmra.mxu0 %v76
    %v159 = vpop.f32.mrf.mxu0
    %v160 = vadd.f32 0.0, %v159
    %v161 = vpop.f32.mrf.mxu0
    %162 = vdwg.mxu0
    %v164 = vsel %vm65, %v28, 0
    %v167 = vsel %vm65, %v29, 0
    %v170 = vsel %vm65, %v30, 0
    %v173 = vsel %vm65, %v31, 0
    %175 = vmatprep.subr.mxu0 0.0
    %176 = vmatpush1.msra.mxu0 0.0
    %177 = vmatprep.subr.mxu0 0.0
    %178 = vmatpush1.msra.mxu0 0.0
    %179 = vmatprep.subr.mxu0 0.0
    %180 = vmatpush1.msra.mxu0 0.0
    %181 = vmatprep.subr.mxu0 0.0
    %182 = vmatpush1.msra.mxu0 0.0
    %183 = vmatprep.subr.mxu0 0.0
    %184 = vmatpush1.msra.mxu0 0.0
    %185 = vmatprep.subr.mxu0 0.0
    %186 = vmatpush1.msra.mxu0 0.0
    %187 = vmatprep.subr.mxu0 0.0
    %188 = vmatpush1.msra.mxu0 0.0
    %189 = vmatprep.subr.mxu0 0.0
    %190 = vmatpush1.msra.mxu0 0.0
    %191 = vmatprep.subr.mxu0 0.0
    %192 = vmatpush1.msra.mxu0 0.0
    %193 = vmatprep.subr.mxu0 0.0
    %194 = vmatpush1.msra.mxu0 0.0
    %195 = vmatprep.subr.mxu0 0.0
    %196 = vmatpush1.msra.mxu0 0.0
    %197 = vmatprep.subr.mxu0 0.0
    %198 = vmatpush1.msra.mxu0 0.0
    %199 = vmatprep.subr.mxu0 0.0
    %200 = vmatpush1.msra.mxu0 0.0
    %201 = vmatprep.subr.mxu0 0.0
    %202 = vmatpush1.msra.mxu0 0.0
    %203 = vmatprep.subr.mxu0 0.0
    %204 = vmatpush1.msra.mxu0 %v54
    %205 = vmatprep.subr.mxu0 0.0
    %206 = vmatpush1.msra.mxu0 %v53
    %207 = vmatprep.subr.mxu0 0.0
    %208 = vmatpush2.msra.mxu0 0.0
    %209 = vmatprep.subr.mxu0 0.0
    %210 = vmatpush2.msra.mxu0 0.0
    %211 = vmatprep.subr.mxu0 0.0
    %212 = vmatpush2.msra.mxu0 0.0
    %213 = vmatprep.subr.mxu0 0.0
    %214 = vmatpush2.msra.mxu0 0.0
    %215 = vmatprep.subr.mxu0 0.0
    %216 = vmatpush2.msra.mxu0 0.0
    %217 = vmatprep.subr.mxu0 0.0
    %218 = vmatpush2.msra.mxu0 0.0
    %219 = vmatprep.subr.mxu0 0.0
    %220 = vmatpush2.msra.mxu0 0.0
    %221 = vmatprep.subr.mxu0 0.0
    %222 = vmatpush2.msra.mxu0 0.0
    %223 = vmatprep.subr.mxu0 0.0
    %224 = vmatpush2.msra.mxu0 0.0
    %225 = vmatprep.subr.mxu0 0.0
    %226 = vmatpush2.msra.mxu0 0.0
    %227 = vmatprep.subr.mxu0 0.0
    %228 = vmatpush2.msra.mxu0 0.0
    %229 = vmatprep.subr.mxu0 0.0
    %230 = vmatpush2.msra.mxu0 0.0
    %231 = vmatprep.subr.mxu0 0.0
    %232 = vmatpush2.msra.mxu0 0.0
    %233 = vmatprep.subr.mxu0 0.0
    %234 = vmatpush2.msra.mxu0 0.0
    %235 = vmatprep.subr.mxu0 0.0
    %236 = vmatpush2.msra.mxu0 0.0
    %237 = vmatprep.subr.mxu0 0.0
    %238 = vmatpush2.msra.mxu0 0.0
    %239 = vmatprep.mubr.f32.mxu0 0.0
    %240 = vmatmul.mubr.f32.gmra.mxu0 %v164
    %v241 = vpop.f32.mrf.mxu0
    %v242 = vadd.f32 0.0, %v241
    %v243 = vpop.f32.mrf.mxu0
    %244 = vmatprep.mubr.f32.mxu0 0.0
    %245 = vmatmul.mubr.f32.gmra.mxu0 %v167
    %v246 = vpop.f32.mrf.mxu0
    %v247 = vadd.f32 0.0, %v246
    %v248 = vpop.f32.mrf.mxu0
    %249 = vmatprep.mubr.f32.mxu0 0.0
    %250 = vmatmul.mubr.f32.gmra.mxu0 %v170
    %v251 = vpop.f32.mrf.mxu0
    %v252 = vadd.f32 0.0, %v251
    %v253 = vpop.f32.mrf.mxu0
    %254 = vmatprep.mubr.f32.mxu0 0.0
    %255 = vmatmul.mubr.f32.gmra.mxu0 %v173
    %v256 = vpop.f32.mrf.mxu0
    %v257 = vadd.f32 0.0, %v256
    %v258 = vpop.f32.mrf.mxu0
    %259 = vdwg.mxu0
    %260 = vmatprep.subr.mxu0 0.0
    %261 = vmatpush1.msra.mxu0 0.0
    %262 = vmatprep.subr.mxu0 0.0
    %263 = vmatpush1.msra.mxu0 0.0
    %264 = vmatprep.subr.mxu0 0.0
    %265 = vmatpush1.msra.mxu0 0.0
    %266 = vmatprep.subr.mxu0 0.0
    %267 = vmatpush1.msra.mxu0 0.0
    %268 = vmatprep.subr.mxu0 0.0
    %269 = vmatpush1.msra.mxu0 0.0
    %270 = vmatprep.subr.mxu0 0.0
    %271 = vmatpush1.msra.mxu0 0.0
    %272 = vmatprep.subr.mxu0 0.0
    %273 = vmatpush1.msra.mxu0 0.0
    %274 = vmatprep.subr.mxu0 0.0
    %275 = vmatpush1.msra.mxu0 0.0
    %276 = vmatprep.subr.mxu0 0.0
    %277 = vmatpush1.msra.mxu0 0.0
    %278 = vmatprep.subr.mxu0 0.0
    %279 = vmatpush1.msra.mxu0 0.0
    %280 = vmatprep.subr.mxu0 0.0
    %281 = vmatpush1.msra.mxu0 0.0
    %282 = vmatprep.subr.mxu0 0.0
    %283 = vmatpush1.msra.mxu0 0.0
    %284 = vmatprep.subr.mxu0 0.0
    %285 = vmatpush1.msra.mxu0 0.0
    %286 = vmatprep.subr.mxu0 0.0
    %287 = vmatpush1.msra.mxu0 0.0
    %288 = vmatprep.subr.mxu0 0.0
    %289 = vmatpush1.msra.mxu0 %v64
    %290 = vmatprep.subr.mxu0 0.0
    %291 = vmatpush1.msra.mxu0 %v63
    %292 = vmatprep.subr.mxu0 0.0
    %293 = vmatpush2.msra.mxu0 0.0
    %294 = vmatprep.subr.mxu0 0.0
    %295 = vmatpush2.msra.mxu0 0.0
    %296 = vmatprep.subr.mxu0 0.0
    %297 = vmatpush2.msra.mxu0 0.0
    %298 = vmatprep.subr.mxu0 0.0
    %299 = vmatpush2.msra.mxu0 0.0
    %300 = vmatprep.subr.mxu0 0.0
    %301 = vmatpush2.msra.mxu0 0.0
    %302 = vmatprep.subr.mxu0 0.0
    %303 = vmatpush2.msra.mxu0 0.0
    %304 = vmatprep.subr.mxu0 0.0
    %305 = vmatpush2.msra.mxu0 0.0
    %306 = vmatprep.subr.mxu0 0.0
    %307 = vmatpush2.msra.mxu0 0.0
    %308 = vmatprep.subr.mxu0 0.0
    %309 = vmatpush2.msra.mxu0 0.0
    %310 = vmatprep.subr.mxu0 0.0
    %311 = vmatpush2.msra.mxu0 0.0
    %312 = vmatprep.subr.mxu0 0.0
    %313 = vmatpush2.msra.mxu0 0.0
    %314 = vmatprep.subr.mxu0 0.0
    %315 = vmatpush2.msra.mxu0 0.0
    %316 = vmatprep.subr.mxu0 0.0
    %317 = vmatpush2.msra.mxu0 0.0
    %318 = vmatprep.subr.mxu0 0.0
    %319 = vmatpush2.msra.mxu0 0.0
    %320 = vmatprep.subr.mxu0 0.0
    %321 = vmatpush2.msra.mxu0 0.0
    %322 = vmatprep.subr.mxu0 0.0
    %323 = vmatpush2.msra.mxu0 0.0
    %324 = vmatprep.mubr.f32.mxu0 0.0
    %325 = vmatmul.mubr.f32.gmra.mxu0 %v164
    %v326 = vpop.f32.mrf.mxu0
    %v327 = vadd.f32 0.0, %v326
    %v328 = vpop.f32.mrf.mxu0
    %329 = vmatprep.mubr.f32.mxu0 0.0
    %330 = vmatmul.mubr.f32.gmra.mxu0 %v167
    %v331 = vpop.f32.mrf.mxu0
    %v332 = vadd.f32 0.0, %v331
    %v333 = vpop.f32.mrf.mxu0
    %334 = vmatprep.mubr.f32.mxu0 0.0
    %335 = vmatmul.mubr.f32.gmra.mxu0 %v170
    %v336 = vpop.f32.mrf.mxu0
    %v337 = vadd.f32 0.0, %v336
    %v338 = vpop.f32.mrf.mxu0
    %339 = vmatprep.mubr.f32.mxu0 0.0
    %340 = vmatmul.mubr.f32.gmra.mxu0 %v173
    %v341 = vpop.f32.mrf.mxu0
    %v342 = vadd.f32 0.0, %v341
    %v343 = vpop.f32.mrf.mxu0
    %344 = vdwg.mxu0
    %v345 = vsub.f32 %v145, %v242
    %v346 = vsub.f32 %v150, %v247
    %v347 = vsub.f32 %v155, %v252
    %v348 = vsub.f32 %v160, %v257
    %v349 = vsub.f32 %v145, %v327
    %v350 = vsub.f32 %v150, %v332
    %v351 = vsub.f32 %v155, %v337
    %v352 = vsub.f32 %v160, %v342
    %v353 = vmul.f32 %v345, %v345
    %v354 = vmul.f32 %v346, %v346
    %v355 = vmul.f32 %v347, %v347
    %v356 = vmul.f32 %v348, %v348
    %v357 = vadd.f32 %v353, %v354
    %v358 = vadd.f32 %v357, %v355
    %v359 = vadd.f32 %v358, %v356
    %v360 = vrot.slane %v359, 4
    %v361 = vadd.f32 %v359, %v360
    %v362 = vrot.slane %v361, 2
    %v363 = vadd.f32 %v361, %v362
    %v364 = vrot.slane %v363, 1
    %v365 = vadd.f32 %v363, %v364
    %v366 = vmul.f32 %v349, %v349
    %v367 = vmul.f32 %v350, %v350
    %v368 = vmul.f32 %v351, %v351
    %v369 = vmul.f32 %v352, %v352
    %v370 = vadd.f32 %v366, %v367
    %v371 = vadd.f32 %v370, %v368
    %v372 = vadd.f32 %v371, %v369
    %v373 = vrot.slane %v372, 4
    %v374 = vadd.f32 %v372, %v373
    %v375 = vrot.slane %v374, 2
    %v376 = vadd.f32 %v374, %v375
    %v377 = vrot.slane %v376, 1
    %v378 = vadd.f32 %v376, %v377
    %v379 = vsub.f32 %v378, %v365
    %v380 = vxor.u32 %v379, 2147483648
    %v381 = vmul.f32 %v380, 1.442695
    %v382 = vpow.pop %v381
    %v383 = vadd.f32 %v382, 1.0
    %v384 = vrcp.pop %v383
    %v385 = vmul.f32 1.0, %v384
    %386 = vst [vmem:[#allocation2] sm:$0x1] %v385
    // Predicated region
    $region22: #{tpu_custom_call.1} parent=1 // pred_check
      _
    $region23: #{tpu_custom_call.1} parent=1 // pred_check_branch
      %388 = sbr.rel (0) target = $region25
    $region24: #{tpu_custom_call.1} parent=1 // pred_region
      %s390 = ssub.s32 16, 16
      %391 = vsyncadd [#allocation3], %s390
      %s393 = sshll.u32 [#allocation2], 4
      %s394 = int_to_ptr.vmem [resolvable:$true] %s393
      %396 = dma.vmem_to_hbm [thread:$0]  %s394, 16, %s5, [#allocation3]
    $region25: #{tpu_custom_call.1} parent=1 // pred_fallthru
      _
    // Predicated region
    $region26: #{tpu_custom_call.1} parent=1 // pred_check
      _
    $region27: #{tpu_custom_call.1} parent=1 // pred_check_branch
      %398 = sbr.rel (0) target = $region29
    $region28: #{tpu_custom_call.1} parent=1 // pred_region
      %399 = dma.done [#allocation3], 16
    $region29: #{tpu_custom_call.1} parent=1 // pred_fallthru
      _
    %400 = vsyncpa [#allocation3], 1

</llo_original>
